<compile_context>
chip_gen: v7x
topology: tpu7x:2x2x1
jax: 0.10.0
libtpu: 0.0.40
codegen_flags: <defaults>
</compile_context>

<pallas_src>
import jax
import jax.numpy as jnp
from jax.experimental import pallas as pl
from jax.experimental.pallas import tpu as pltpu


NUM_CLASSES = 3
IN_CH = 3               # channel count after the 1->3 repeat
LANES = 128
MAX_ROW_TILE = 512      # 512*128 = 64K pixels/step -> <=768 KiB per input block


def _round_up(v, m):
    return ((v + m - 1) // m) * m


def _cdiv(a, b):
    return (a + b - 1) // b


def _pick_row_tile(n, rows):
    """Pick a sublane row-tile: >=8 grid steps when possible, <=64K px/step."""
    target_steps = 8
    tile = _cdiv(max(1, n * rows), target_steps)
    tile = min(tile, MAX_ROW_TILE, rows)
    tile = _round_up(max(tile, 1), 8)
    if tile >= rows:
        return rows          # full-extent block dim (always legal)
    return tile              # multiple of 8; partial last block is fine


def _seg_head_kernel(x_ref, w_ref, b_ref, o_ref):
    """1x1-conv head: out[k] = sum_c x[c] * w[c,k] + b[k] (pure VPU).

    x_ref: (1, CIN, row_tile, 128)          VMEM, dense (sublane, lane) slabs
    w_ref: (CIN, NUM_CLASSES)               SMEM scalars
    b_ref: (NUM_CLASSES,)                   SMEM scalars
    o_ref: (1, NUM_CLASSES, row_tile, 128)  VMEM, dense stores
    """
    cin = x_ref.shape[1]
    ncls = o_ref.shape[1]
    # Hoist channel slabs and all weight/bias scalars out of the MAC chain.
    xs = [x_ref[0, c] for c in range(cin)]
    ws = [[w_ref[c, k] for k in range(ncls)] for c in range(cin)]
    bs = [b_ref[k] for k in range(ncls)]
    for k in range(ncls):
        acc = xs[0] * ws[0][k] + bs[k]
        for c in range(1, cin):
            acc = acc + xs[c] * ws[c][k]
        o_ref[0, k] = acc.astype(o_ref.dtype)


def _seg_head(x4, w, b, row_tile):
    """x4: (N, CIN, rows, 128) f32; w: (CIN, NUM_CLASSES); b: (NUM_CLASSES,)."""
    n, cin, rows, lanes = x4.shape
    assert lanes == LANES
    grid = (n, _cdiv(rows, row_tile))
    hw_pad = rows * LANES
    flops = 2 * cin * NUM_CLASSES * n * hw_pad
    bytes_accessed = 4 * (cin + NUM_CLASSES) * n * hw_pad
    return pl.pallas_call(
        _seg_head_kernel,
        out_shape=jax.ShapeDtypeStruct((n, NUM_CLASSES, rows, LANES), x4.dtype),
        grid=grid,
        in_specs=[
            pl.BlockSpec((1, cin, row_tile, LANES), lambda i, t: (i, 0, t, 0)),
            pl.BlockSpec(memory_space=pltpu.MemorySpace.SMEM),   # w
            pl.BlockSpec(memory_space=pltpu.MemorySpace.SMEM),   # b
        ],
        out_specs=pl.BlockSpec((1, NUM_CLASSES, row_tile, LANES),
                               lambda i, t: (i, 0, t, 0)),
        compiler_params=pltpu.CompilerParams(
            dimension_semantics=("parallel", "parallel")),
        cost_estimate=pl.CostEstimate(
            flops=flops, transcendentals=0, bytes_accessed=bytes_accessed),
    )(x4, w, b)


def launch_seg_forward(x, w, b):
    """Forward pass mirroring launch_seg.forward.

    x: (N, C, H, W) float32, C in {1, 3}.  Returns (N, NUM_CLASSES, H, W).
    """
    n, c, h, wd = x.shape
    assert c in (1, IN_CH), f"expected 1 or {IN_CH} input channels, got {c}"
    hw = h * wd

    if c == 1:
        # x.repeat(1,3,1,1) followed by the 1x1 conv is equivalent to a 1-channel
        # 1x1 conv with weights summed over the input-channel axis: avoid the
        # materialized 3x HBM copy entirely.
        w_eff = jnp.sum(w, axis=0, keepdims=True)    # (1, NUM_CLASSES)
        cin_eff = 1
    else:
        w_eff = w
        cin_eff = IN_CH

    # Lay pixels out on a dense (rows, 128) sublane/lane grid (NCHW-native,
    # no transposes). Only pad to the next multiple of 128 when HW is unaligned.
    x_flat = x.reshape(n, cin_eff, hw)
    hw_pad = _round_up(hw, LANES)
    if hw_pad != hw:
        x_flat = jnp.pad(x_flat, ((0, 0), (0, 0), (0, hw_pad - hw)))
    rows = hw_pad // LANES
    x4 = x_flat.reshape(n, cin_eff, rows, LANES)

    row_tile = _pick_row_tile(n, rows)
    logits4 = _seg_head(x4, w_eff, b, row_tile)       # (N, NUM_CLASSES, rows, 128)
    logits = logits4.reshape(n, NUM_CLASSES, hw_pad)[:, :, :hw]
    return logits.reshape(n, NUM_CLASSES, h, wd)


def init_params(key):
    """Deterministic 1x1-conv head parameters (Cin=3 -> num_classes=3)."""
    kw, kb = jax.random.split(key)
    w = jax.random.normal(kw, (IN_CH, NUM_CLASSES), jnp.float32) * 0.1
    b = jax.random.normal(kb, (NUM_CLASSES,), jnp.float32) * 0.01
    return w, b


if __name__ == "__main__":
    key = jax.random.PRNGKey(0)
    kx1, kx3, kp = jax.random.split(key, 3)

    w, b = init_params(kp)
    fwd = jax.jit(launch_seg_forward)

    # Path 1: single-channel input (exercises the folded 1->3 channel repeat).
    x1 = jax.random.normal(kx1, (2, 1, 16, 16), jnp.float32)
    out1 = jax.block_until_ready(fwd(x1, w, b))
    x1r = jnp.broadcast_to(x1, (2, IN_CH, 16, 16))
    ref1 = jnp.einsum("nchw,ck->nkhw", x1r, w) + b[None, :, None, None]
    assert out1.shape == (2, NUM_CLASSES, 16, 16)
    assert jnp.allclose(out1, ref1, atol=1e-5, rtol=1e-5)

    # Path 2: 3-channel input.
    x3 = jax.random.normal(kx3, (2, IN_CH, 16, 16), jnp.float32)
    out3 = jax.block_until_ready(fwd(x3, w, b))
    ref3 = jnp.einsum("nchw,ck->nkhw", x3, w) + b[None, :, None, None]
    assert out3.shape == (2, NUM_CLASSES, 16, 16)
    assert jnp.allclose(out3, ref3, atol=1e-5, rtol=1e-5)

    print("KERNEL_OK")
</pallas_src>

<mosaic_0001>
module attributes {stable_mosaic.version = 11 : i64} {
  func.func @_seg_head_kernel(%arg0: i32, %arg1: i32, %arg2: memref<1x1x2x128xf32, #tpu.memory_space<vmem>>, %arg3: memref<1x3xf32, #tpu.memory_space<smem>>, %arg4: memref<3xf32, #tpu.memory_space<smem>>, %arg5: memref<1x3x2x128xf32, #tpu.memory_space<vmem>>) attributes {dimension_semantics = [#tpu.dimension_semantics<parallel>, #tpu.dimension_semantics<parallel>], iteration_bounds = array<i64: 2, 1>, scalar_prefetch = 0 : i64, scratch_operands = 0 : i64, tpu.core_type = #tpu.core_type<tc>, window_params = [{transform_indices = @transform_0, window_bounds = array<i64: 1, 1, 2, 128>}, {transform_indices = @transform_1, window_bounds = array<i64: 1, 3>}, {transform_indices = @transform_2, window_bounds = array<i64: 3>}, {transform_indices = @transform_3, window_bounds = array<i64: 1, 3, 2, 128>}]} {
    %c0 = arith.constant 0 : index
    %c0_0 = arith.constant 0 : index
    %c0_1 = arith.constant 0 : index
    %c0_2 = arith.constant 0 : index
    %0 = vector.load %arg2[%c0, %c0_0, %c0_1, %c0_2] : memref<1x1x2x128xf32, #tpu.memory_space<vmem>>, vector<1x1x2x128xf32>
    %1 = vector.shape_cast %0 : vector<1x1x2x128xf32> to vector<2x128xf32>
    %c0_3 = arith.constant 0 : index
    %c0_4 = arith.constant 0 : index
    %2 = memref.load %arg3[%c0_3, %c0_4] : memref<1x3xf32, #tpu.memory_space<smem>>
    %c0_5 = arith.constant 0 : index
    %c1 = arith.constant 1 : index
    %3 = memref.load %arg3[%c0_5, %c1] : memref<1x3xf32, #tpu.memory_space<smem>>
    %c0_6 = arith.constant 0 : index
    %c2 = arith.constant 2 : index
    %4 = memref.load %arg3[%c0_6, %c2] : memref<1x3xf32, #tpu.memory_space<smem>>
    %c0_7 = arith.constant 0 : index
    %5 = memref.load %arg4[%c0_7] : memref<3xf32, #tpu.memory_space<smem>>
    %c1_8 = arith.constant 1 : index
    %6 = memref.load %arg4[%c1_8] : memref<3xf32, #tpu.memory_space<smem>>
    %c2_9 = arith.constant 2 : index
    %7 = memref.load %arg4[%c2_9] : memref<3xf32, #tpu.memory_space<smem>>
    %8 = vector.broadcast %2 : f32 to vector<2x128xf32>
    %9 = arith.mulf %1, %8 : vector<2x128xf32>
    %10 = vector.broadcast %5 : f32 to vector<2x128xf32>
    %11 = arith.addf %9, %10 : vector<2x128xf32>
    %c0_10 = arith.constant 0 : index
    %c0_11 = arith.constant 0 : index
    %c0_12 = arith.constant 0 : index
    %c0_13 = arith.constant 0 : index
    %12 = vector.load %arg5[%c0_10, %c0_11, %c0_12, %c0_13] : memref<1x3x2x128xf32, #tpu.memory_space<vmem>>, vector<1x1x2x128xf32>
    %13 = vector.shape_cast %12 : vector<1x1x2x128xf32> to vector<2x128xf32>
    %14 = vector.shape_cast %11 : vector<2x128xf32> to vector<1x1x2x128xf32>
    tpu.vector_store %arg5[%c0_10, %c0_11, %c0_12, %c0_13], %14 {strides = array<i32>} : memref<1x3x2x128xf32, #tpu.memory_space<vmem>>, vector<1x1x2x128xf32>,
    %15 = vector.broadcast %3 : f32 to vector<2x128xf32>
    %16 = arith.mulf %1, %15 : vector<2x128xf32>
    %17 = vector.broadcast %6 : f32 to vector<2x128xf32>
    %18 = arith.addf %16, %17 : vector<2x128xf32>
    %c0_14 = arith.constant 0 : index
    %c1_15 = arith.constant 1 : index
    %c0_16 = arith.constant 0 : index
    %c0_17 = arith.constant 0 : index
    %19 = vector.load %arg5[%c0_14, %c1_15, %c0_16, %c0_17] : memref<1x3x2x128xf32, #tpu.memory_space<vmem>>, vector<1x1x2x128xf32>
    %20 = vector.shape_cast %19 : vector<1x1x2x128xf32> to vector<2x128xf32>
    %21 = vector.shape_cast %18 : vector<2x128xf32> to vector<1x1x2x128xf32>
    tpu.vector_store %arg5[%c0_14, %c1_15, %c0_16, %c0_17], %21 {strides = array<i32>} : memref<1x3x2x128xf32, #tpu.memory_space<vmem>>, vector<1x1x2x128xf32>,
    %22 = vector.broadcast %4 : f32 to vector<2x128xf32>
    %23 = arith.mulf %1, %22 : vector<2x128xf32>
    %24 = vector.broadcast %7 : f32 to vector<2x128xf32>
    %25 = arith.addf %23, %24 : vector<2x128xf32>
    %c0_18 = arith.constant 0 : index
    %c2_19 = arith.constant 2 : index
    %c0_20 = arith.constant 0 : index
    %c0_21 = arith.constant 0 : index
    %26 = vector.load %arg5[%c0_18, %c2_19, %c0_20, %c0_21] : memref<1x3x2x128xf32, #tpu.memory_space<vmem>>, vector<1x1x2x128xf32>
    %27 = vector.shape_cast %26 : vector<1x1x2x128xf32> to vector<2x128xf32>
    %28 = vector.shape_cast %25 : vector<2x128xf32> to vector<1x1x2x128xf32>
    tpu.vector_store %arg5[%c0_18, %c2_19, %c0_20, %c0_21], %28 {strides = array<i32>} : memref<1x3x2x128xf32, #tpu.memory_space<vmem>>, vector<1x1x2x128xf32>,
    return
  }
  func.func @transform_0(%arg0: i32, %arg1: i32) -> (i32, i32, i32, i32) {
    %c0_i32 = arith.constant 0 : i32
    %c0_i32_0 = arith.constant 0 : i32
    %c0_i32_1 = arith.constant 0 : i32
    return %arg0, %c0_i32, %arg1, %c0_i32_0 : i32, i32, i32, i32
  }
  func.func @transform_1(%arg0: i32, %arg1: i32) -> (i32, i32) {
    %c0_i32 = arith.constant 0 : i32
    %c0_i32_0 = arith.constant 0 : i32
    %c0_i32_1 = arith.constant 0 : i32
    return %c0_i32, %c0_i32_0 : i32, i32
  }
  func.func @transform_2(%arg0: i32, %arg1: i32) -> i32 {
    %c0_i32 = arith.constant 0 : i32
    %c0_i32_0 = arith.constant 0 : i32
    return %c0_i32 : i32
  }
  func.func @transform_3(%arg0: i32, %arg1: i32) -> (i32, i32, i32, i32) {
    %c0_i32 = arith.constant 0 : i32
    %c0_i32_0 = arith.constant 0 : i32
    %c0_i32_1 = arith.constant 0 : i32
    return %arg0, %c0_i32, %arg1, %c0_i32_0 : i32, i32, i32, i32
  }
}

</mosaic_0001>

<llo_original>
// kernel: launch_seg_forward.1
$region0: #{launch_seg_forward.1}
  #allocation0 [shape = 'u32[]', space=smem, size = 0x4, offset = 0x4, fixed_abs, tag = 'smem constant byte address 0x4 - core index']
  #allocation1 [shape = 'u32[144,128]{1,0:T(1,128)}', space=vmem, size = 0x12000, scoped, tag = 'internal scratch']
  %s0 = inlined_call_operand.vmem [shape: f32[2,1,2,128], index: 0, kind: input, shape index: {}]
  %s1 = inlined_call_operand.vmem [shape: f32[1,3], index: 1, kind: input, shape index: {}]
  %s2 = inlined_call_operand.vmem [shape: f32[3], index: 2, kind: input, shape index: {}]
  %s3 = inlined_call_operand.vmem [shape: f32[2,3,2,128], index: 3, kind: output, shape index: {}]
  %s4 = sld [smem:[#allocation0]]
  $region53: #{launch_seg_forward.1} parent=0
    _
  %s6 = ssub.s32 1, %s4
  %s7 = scalar_select 0, %s6, %s4
  $region1: #{launch_seg_forward.1} parent=0
    #allocation2 [shape = 'u8[512]{0}', space=smem, size = 0x200, scoped, tag = 'input window, operand 1, single buffered']
    #allocation3 [shape = 's32[2]{0}', space=sflag, size = 0x8, scoped, tag = 'scoped memory for launch_seg_forward.1']
    #allocation4 [shape = 'u8[512]{0}', space=smem, size = 0x200, scoped, tag = 'input window, operand 2, single buffered']
    #allocation5 [shape = 's32[1]{0}', space=sflag, size = 0x4, scoped, tag = 'scoped memory for launch_seg_forward.1']
    %8 = vsyncpa [#allocation3], 0
    %9 = vsyncpa [#allocation5], 0
    loop: start=0, step=1, limit=4
    $region2: #{launch_seg_forward.1} parent=1 // loop_pre_header
      _
    $region3: #{launch_seg_forward.1} parent=1 // loop_header
      %s11 = sphi 0, %s15
      %p12 = scmp.ge.s32.totalorder %s11, 4
      %s18 = sphi 0, %s30
      %s19 = sphi 0, %s26
      %s20 = sphi 0, %s18
      %s21 = sphi 0, %s19
      %s22 = sphi 0, %s20
      %s23 = sphi 0, %s21
      %s35 = sphi 0, %s37
      %s38 = sphi 0, %s35
      %s39 = sphi 0, %s38
      %s55 = sphi 0, %s39
      %s59 = sphi 0, %s59
      %s61 = sphi 0, %s59
      %s62 = sphi 0, %s61
      %s76 = sphi 0, %s62
      %s80 = sphi 0, %s80
      %s82 = sphi 0, %s80
      %s83 = sphi 0, %s82
      %s97 = sphi 0, %s83
      %s105 = sphi 0, %s107
      %s108 = sphi 0, %s105
      %s109 = sphi 0, %s108
      %s125 = sphi 0, %s109
    $region4: #{launch_seg_forward.1} parent=1 // loop_header_branch
      %14 = sbr.rel (%p12) target = $region8
    $region5: #{launch_seg_forward.1} parent=1 // loop_body
      %s16 = ssub.s32 %s11, 1
      %s17 = ssub.s32 %s11, 2
      %s24 = sadd.s32 1, %s19
      %p25 = scmp.ge.s32.totalorder %s24, 1
      %s26 = scalar_select %p25, 0, %s24
      %s27 = sadd.s32 1, %s18
      %s28 = scalar_select %p25, %s27, %s18
      %p29 = scmp.ge.s32.totalorder %s28, 2
      %s30 = scalar_select %p29, 0, %s28
      %s31 = ssub.s32 %s18, %s30
      %s32 = ssub.s32 %s19, %s26
      %s33 = sor.u32 %s31, %s32
      %p34 = scmp.eq.s32.totalorder %s33, 0
      %s36 = sadd.s32 %s35, 1
      %s37 = scalar_select %p34, %s35, %s36
      %p40 = pneg %p34
      %p41 = scmp.eq.s32.totalorder %s11, 1
      %p42 = por %p40, %p41
      %p43 = scmp.ne.s32.totalorder %s35, %s38
      %p44 = scmp.eq.s32.totalorder %s11, 0
      %p45 = por %p43, %p44
      %p46 = scmp.ne.s32.totalorder %s35, %s38
      %p47 = scmp.eq.s32.totalorder %s16, 1
      %p48 = por %p46, %p47
      %p49 = scmp.ne.s32.totalorder %s38, %s39
      %p50 = scmp.eq.s32.totalorder %s16, 0
      %p51 = por %p49, %p50
      %p52 = scmp.ne.s32.totalorder %s38, %s39
      %p53 = scmp.eq.s32.totalorder %s17, 1
      %p54 = por %p52, %p53
      %p56 = scmp.ne.s32.totalorder %s39, %s55
      %p57 = scmp.eq.s32.totalorder %s17, 0
      %p58 = por %p56, %p57
      %s60 = sadd.s32 %s59, 1
      %p63 = scmp.eq.s32.totalorder %s11, 1
      %p64 = scmp.ne.s32.totalorder %s59, %s61
      %p65 = scmp.eq.s32.totalorder %s11, 0
      %p66 = por %p64, %p65
      %p67 = scmp.ne.s32.totalorder %s59, %s61
      %p68 = scmp.eq.s32.totalorder %s16, 1
      %p69 = por %p67, %p68
      %p70 = scmp.ne.s32.totalorder %s61, %s62
      %p71 = scmp.eq.s32.totalorder %s16, 0
      %p72 = por %p70, %p71
      %p73 = scmp.ne.s32.totalorder %s61, %s62
      %p74 = scmp.eq.s32.totalorder %s17, 1
      %p75 = por %p73, %p74
      %p77 = scmp.ne.s32.totalorder %s62, %s76
      %p78 = scmp.eq.s32.totalorder %s17, 0
      %p79 = por %p77, %p78
      %s81 = sadd.s32 %s80, 1
      %p84 = scmp.eq.s32.totalorder %s11, 1
      %p85 = scmp.ne.s32.totalorder %s80, %s82
      %p86 = scmp.eq.s32.totalorder %s11, 0
      %p87 = por %p85, %p86
      %p88 = scmp.ne.s32.totalorder %s80, %s82
      %p89 = scmp.eq.s32.totalorder %s16, 1
      %p90 = por %p88, %p89
      %p91 = scmp.ne.s32.totalorder %s82, %s83
      %p92 = scmp.eq.s32.totalorder %s16, 0
      %p93 = por %p91, %p92
      %p94 = scmp.ne.s32.totalorder %s82, %s83
      %p95 = scmp.eq.s32.totalorder %s17, 1
      %p96 = por %p94, %p95
      %p98 = scmp.ne.s32.totalorder %s83, %s97
      %p99 = scmp.eq.s32.totalorder %s17, 0
      %p100 = por %p98, %p99
      %s101 = ssub.s32 %s18, %s30
      %s102 = ssub.s32 %s19, %s26
      %s103 = sor.u32 %s101, %s102
      %p104 = scmp.eq.s32.totalorder %s103, 0
      %s106 = sadd.s32 %s105, 1
      %s107 = scalar_select %p104, %s105, %s106
      %p110 = pneg %p104
      %p111 = scmp.eq.s32.totalorder %s11, 1
      %p112 = por %p110, %p111
      %p113 = scmp.ne.s32.totalorder %s105, %s108
      %p114 = scmp.eq.s32.totalorder %s11, 0
      %p115 = por %p113, %p114
      %p116 = scmp.ne.s32.totalorder %s105, %s108
      %p117 = scmp.eq.s32.totalorder %s16, 1
      %p118 = por %p116, %p117
      %p119 = scmp.ne.s32.totalorder %s108, %s109
      %p120 = scmp.eq.s32.totalorder %s16, 0
      %p121 = por %p119, %p120
      %p122 = scmp.ne.s32.totalorder %s108, %s109
      %p123 = scmp.eq.s32.totalorder %s17, 1
      %p124 = por %p122, %p123
      %p126 = scmp.ne.s32.totalorder %s109, %s125
      %p127 = scmp.eq.s32.totalorder %s17, 0
      %p128 = por %p126, %p127
      %p129 = scmp.le.s32.totalorder 1, %s11
      %p130 = scmp.lt.s32.totalorder %s11, 3
      %p131 = pnand %p129, %p130
      %p132 = pneg %p131
      // Predicated region
      $region9: #{launch_seg_forward.1} parent=5 // pred_check
        _
      $region10: #{launch_seg_forward.1} parent=5 // pred_check_branch
        %134 = sbr.rel (%p131) target = $region12
      $region11: #{launch_seg_forward.1} parent=5 // pred_region
        %s135 = ssub.s32 %s11, 1
        // Predicated region
        $region13: #{launch_seg_forward.1} parent=11 // pred_check
          %p136 = pneg %p72
        $region14: #{launch_seg_forward.1} parent=11 // pred_check_branch
          %138 = sbr.rel (%p136) target = $region16
        $region15: #{launch_seg_forward.1} parent=11 // pred_region
          %s140 = ssub.s32 16, 16
          %141 = vsyncadd [#allocation3], %s140
          %s143 = sshll.u32 %s1, 4
          %s144 = int_to_ptr.vmem [resolvable:$true] %s143
          %146 = dma.vmem_to_smem %s144, 16, [#allocation2], [#allocation3]
        $region16: #{launch_seg_forward.1} parent=11 // pred_fallthru
          _
        // Predicated region
        $region17: #{launch_seg_forward.1} parent=11 // pred_check
          %p147 = pneg %p93
        $region18: #{launch_seg_forward.1} parent=11 // pred_check_branch
          %149 = sbr.rel (%p147) target = $region20
        $region19: #{launch_seg_forward.1} parent=11 // pred_region
          %s151 = ssub.s32 16, 16
          %152 = vsyncadd [#allocation5], %s151
          %s154 = sshll.u32 %s2, 4
          %s155 = int_to_ptr.vmem [resolvable:$true] %s154
          %157 = dma.vmem_to_smem %s155, 16, [#allocation4], [#allocation5]
        $region20: #{launch_seg_forward.1} parent=11 // pred_fallthru
          _
      $region12: #{launch_seg_forward.1} parent=5 // pred_fallthru
        _
      %p158 = scmp.lt.s32.totalorder %s11, 2
      // Predicated region
      $region21: #{launch_seg_forward.1} parent=5 // pred_check
        %p159 = pneg %p158
      $region22: #{launch_seg_forward.1} parent=5 // pred_check_branch
        %161 = sbr.rel (%p159) target = $region24
      $region23: #{launch_seg_forward.1} parent=5 // pred_region
        // Predicated region
        $region25: #{launch_seg_forward.1} parent=23 // pred_check
          %p162 = pneg %p45
        $region26: #{launch_seg_forward.1} parent=23 // pred_check_branch
          %164 = sbr.rel (%p162) target = $region28
        $region27: #{launch_seg_forward.1} parent=23 // pred_region
          %p165 = scmp.lt.s32.totalorder %s18, 1
          %s166 = scalar_select %p165, %s18, 1
          %p167 = scmp.lt.s32.totalorder %s19, 0
          %s168 = scalar_select %p167, %s19, 0
          %s169 = sadd.s32 %s168, %s166
          %s170 = smul.addr %s169, 2
          %s171 = scalar_lea.vmem %s0, %s170
        $region28: #{launch_seg_forward.1} parent=23 // pred_fallthru
          _
      $region24: #{launch_seg_forward.1} parent=5 // pred_fallthru
        _
      %p172 = scmp.le.s32.totalorder 1, %s11
      %p173 = scmp.lt.s32.totalorder %s11, 3
      %p174 = pnand %p172, %p173
      %p175 = pneg %p174
      // Predicated region
      $region29: #{launch_seg_forward.1} parent=5 // pred_check
        _
      $region30: #{launch_seg_forward.1} parent=5 // pred_check_branch
        %177 = sbr.rel (%p174) target = $region32
      $region31: #{launch_seg_forward.1} parent=5 // pred_region
        %s178 = ssub.s32 %s11, 1
        // Predicated region
        $region33: #{launch_seg_forward.1} parent=31 // pred_check
          %p179 = pneg %p72
        $region34: #{launch_seg_forward.1} parent=31 // pred_check_branch
          %181 = sbr.rel (%p179) target = $region36
        $region35: #{launch_seg_forward.1} parent=31 // pred_region
          %182 = dma.done [#allocation3], 16
        $region36: #{launch_seg_forward.1} parent=31 // pred_fallthru
          _
        // Predicated region
        $region37: #{launch_seg_forward.1} parent=31 // pred_check
          %p183 = pneg %p93
        $region38: #{launch_seg_forward.1} parent=31 // pred_check_branch
          %185 = sbr.rel (%p183) target = $region40
        $region39: #{launch_seg_forward.1} parent=31 // pred_region
          %186 = dma.done [#allocation5], 16
        $region40: #{launch_seg_forward.1} parent=31 // pred_fallthru
          _
        %187 = sfence
        %p188 = scmp.lt.s32.totalorder %s20, 1
        %s189 = scalar_select %p188, %s20, 1
        %p190 = scmp.lt.s32.totalorder %s21, 0
        %s191 = scalar_select %p190, %s21, 0
        %s192 = sadd.s32 %s191, %s189
        %s193 = smul.addr %s192, 2
        %s194 = scalar_lea.vmem %s0, %s193
        %p195 = pneg %p51
        %p196 = pneg %p48
        %p197 = pneg %p72
        %p198 = pneg %p69
        %p199 = pneg %p93
        %p200 = pneg %p90
        %p201 = pneg %p121
        %p202 = pneg %p118
        %p203 = scmp.lt.s32.totalorder %s20, 1
        %s204 = scalar_select %p203, %s20, 1
        %p205 = scmp.lt.s32.totalorder %s21, 0
        %s206 = scalar_select %p205, %s21, 0
        %s207 = smul.addr %s204, 3
        %s208 = sadd.s32 %s206, %s207
        %s209 = smul.addr %s208, 2
        %s210 = scalar_lea.vmem %s3, %s209
        %p211 = scmp.lt.s32.totalorder %s20, 1
        %s212 = scalar_select %p211, %s20, 1
        %p213 = scmp.lt.s32.totalorder %s21, 0
        %s214 = scalar_select %p213, %s21, 0
        %s215 = sadd.s32 %s214, %s212
        %s216 = smul.addr %s215, 2
        %s217 = scalar_lea.vmem %s0, %s216
        %p218 = scmp.lt.s32.totalorder %s20, 1
        %s219 = scalar_select %p218, %s20, 1
        %p220 = scmp.lt.s32.totalorder %s21, 0
        %s221 = scalar_select %p220, %s21, 0
        %s222 = smul.addr %s219, 3
        %s223 = sadd.s32 %s221, %s222
        %s224 = smul.addr %s223, 2
        %s225 = scalar_lea.vmem %s3, %s224
        %v226 = vld [vmem:[%s217] sm:$0x3]
        %s227 = sld [smem:[#allocation2]]
        %s228 = sld [smem:[#allocation2 + $0x1]]
        %s229 = sld [smem:[#allocation2 + $0x2]]
        %s230 = sld [smem:[#allocation4]]
        %s231 = sld [smem:[#allocation4 + $0x1]]
        %s232 = sld [smem:[#allocation4 + $0x2]]
        %v233 = vstv %s227
        %v234 = vmul.f32 %v226, %v233
        %v235 = vstv %s230
        %v236 = vadd.f32 %v234, %v235
        %237 = vst [vmem:[%s225] sm:$0x3] %v236
        %v238 = vstv %s228
        %v239 = vmul.f32 %v226, %v238
        %v240 = vstv %s231
        %v241 = vadd.f32 %v239, %v240
        %s242 = scalar_lea.vmem %s225, 2
        %243 = vst [vmem:[%s242] sm:$0x3] %v241
        %v244 = vstv %s229
        %v245 = vmul.f32 %v226, %v244
        %v246 = vstv %s232
        %v247 = vadd.f32 %v245, %v246
        %s248 = scalar_lea.vmem %s225, 4
        %249 = vst [vmem:[%s248] sm:$0x3] %v247
        %p250 = scmp.lt.s32.totalorder %s20, 1
        %s251 = scalar_select %p250, %s20, 1
        %p252 = scmp.lt.s32.totalorder %s21, 0
        %s253 = scalar_select %p252, %s21, 0
        %s254 = smul.addr %s251, 3
        %s255 = sadd.s32 %s253, %s254
        %s256 = smul.addr %s255, 2
        %s257 = scalar_lea.vmem %s3, %s256
        // Predicated region
        $region41: #{launch_seg_forward.1} parent=31 // pred_check
          %p258 = pneg %p118
        $region42: #{launch_seg_forward.1} parent=31 // pred_check_branch
          %260 = sbr.rel (%p258) target = $region44
        $region43: #{launch_seg_forward.1} parent=31 // pred_region
          _
        $region44: #{launch_seg_forward.1} parent=31 // pred_fallthru
          _
      $region32: #{launch_seg_forward.1} parent=5 // pred_fallthru
        _
      %p261 = scmp.le.s32.totalorder 2, %s11
      // Predicated region
      $region45: #{launch_seg_forward.1} parent=5 // pred_check
        %p262 = pneg %p261
      $region46: #{launch_seg_forward.1} parent=5 // pred_check_branch
        %264 = sbr.rel (%p262) target = $region48
      $region47: #{launch_seg_forward.1} parent=5 // pred_region
        %s265 = ssub.s32 %s11, 2
        // Predicated region
        $region49: #{launch_seg_forward.1} parent=47 // pred_check
          %p266 = pneg %p124
        $region50: #{launch_seg_forward.1} parent=47 // pred_check_branch
          %268 = sbr.rel (%p266) target = $region52
        $region51: #{launch_seg_forward.1} parent=47 // pred_region
          %p269 = scmp.lt.s32.totalorder %s22, 1
          %s270 = scalar_select %p269, %s22, 1
          %p271 = scmp.lt.s32.totalorder %s23, 0
          %s272 = scalar_select %p271, %s23, 0
          %s273 = smul.addr %s270, 3
          %s274 = sadd.s32 %s272, %s273
          %s275 = smul.addr %s274, 2
          %s276 = scalar_lea.vmem %s3, %s275
        $region52: #{launch_seg_forward.1} parent=47 // pred_fallthru
          _
      $region48: #{launch_seg_forward.1} parent=5 // pred_fallthru
        _
    $region6: #{launch_seg_forward.1} parent=1 // loop_footer
      %s15 = sadd.s32 1, %s11
    $region7: #{launch_seg_forward.1} parent=1 // loop_footer_branch
      %10 = sbr.rel target = $region3
    $region8: #{launch_seg_forward.1} parent=1 // loop_exit
      _
    %277 = vsyncpa [#allocation3], 1
    %s278 = scalar_lea.sflag [#allocation3], 1
    %279 = vsyncpa %s278, 1
    %280 = vsyncpa [#allocation5], 1

</llo_original>
